<compile_context>
chip_gen: v5e
topology: v5e:2x2
jax: 0.10.0
libtpu: 0.0.40
codegen_flags: <defaults>
</compile_context>

<pallas_src>
import functools

import jax
import jax.numpy as jnp
import numpy as np
from jax import lax
from jax.experimental import pallas as pl
from jax.experimental.pallas import tpu as pltpu


def _round_up(x, m):
    return ((x + m - 1) // m) * m


_WEIGHT_RESIDENT_BUDGET = 14 * 1024 * 1024   # double-buffered weight slab cap
_VMEM_LIMIT_CAP = 32 * 1024 * 1024           # stays well inside v7x's 64 MiB


# ----------------------------- Pallas kernel ------------------------------ #
def _make_gemm_bias_relu_kernel(tk, resident):
    """relu(P @ W + b) with f32 accumulation directly in the output tile.

    grid = (OC tiles j, M tiles i, K tiles k); axis 2 (k) is the reduction.
      p_ref : (tm, tk)      bf16 im2col patch tile (streams over k)
      w_ref : (K_pad, tn)   bf16 VMEM-resident weight K-slab  (resident=True)
              (tk, tn)      bf16 streamed weight tile         (resident=False)
      b_ref : (1, tn)       f32 bias tile
      o_ref : (tm, tn)      f32 output tile; resident across k (index_map
                            ignores k) so it doubles as the accumulator.
    """

    def kernel(p_ref, w_ref, b_ref, o_ref):
        k = pl.program_id(2)

        @pl.when(k == 0)
        def _init():
            o_ref[...] = jnp.zeros_like(o_ref)

        if resident:
            k0 = pl.multiple_of(k * tk, tk)
            w_tile = w_ref[pl.ds(k0, tk), :]
        else:
            w_tile = w_ref[...]

        o_ref[...] += jnp.dot(p_ref[...], w_tile,
                              preferred_element_type=jnp.float32)

        @pl.when(k == pl.num_programs(2) - 1)
        def _finalize():
            o_ref[...] = jnp.maximum(o_ref[...] + b_ref[...], 0.0)

    return kernel


def _pick_tiles(M, K_pad, OC_pad):
    # tm: multiple of 16 (bf16 sublane packing), capped at 512.
    tm = min(512, _round_up(max(M, 16), 16))
    # tk: largest 128-multiple divisor of K_pad up to 512.
    tk = next(t for t in (512, 384, 256, 128) if K_pad % t == 0)
    # tn: prefer all output channels in one lane-dense tile when the resident
    # weight slab fits the VMEM budget; otherwise the largest divisor <= 512.
    tn_candidates = [OC_pad] + [t for t in (512, 384, 256, 128)
                                if t < OC_pad and OC_pad % t == 0]
    for tn in tn_candidates:
        if 2 * K_pad * tn * 2 <= _WEIGHT_RESIDENT_BUDGET:
            return tm, tn, tk, True
    # Weight slab too large even at the smallest tn: stream (tk, tn) tiles.
    tn = next(t for t in (512, 384, 256, 128) if OC_pad % t == 0)
    return tm, tn, tk, False


def _matmul_bias_relu(patches, weight, bias):
    """relu(patches @ weight + bias) — bf16 inputs, f32 accumulate/output."""
    M, K_pad = patches.shape
    _, OC_pad = weight.shape
    tm, tn, tk, resident = _pick_tiles(M, K_pad, OC_pad)

    # Grid order (j, i, k): the resident weight slab (index_map (0, j)) stays
    # in VMEM across the entire inner (i, k) sweep, so the weight matrix is
    # read from HBM only OC_pad/tn times for the whole grid (vs. once per M
    # tile with streamed (k, j) tiles).  k stays innermost for accumulation.
    grid = (OC_pad // tn, pl.cdiv(M, tm), K_pad // tk)

    if resident:
        w_spec = pl.BlockSpec((K_pad, tn), lambda j, i, k: (0, j))
        w_buf_bytes = K_pad * tn * 2
    else:
        w_spec = pl.BlockSpec((tk, tn), lambda j, i, k: (k, j))
        w_buf_bytes = tk * tn * 2

    # Double-buffered VMEM footprint + headroom, capped for v7x (64 MiB phys).
    vmem_bytes = 2 * (tm * tk * 2 + w_buf_bytes + tn * 4 + tm * tn * 4)
    vmem_limit = int(min(_VMEM_LIMIT_CAP,
                         max(16 * 1024 * 1024, vmem_bytes + 4 * 1024 * 1024)))

    kernel = _make_gemm_bias_relu_kernel(tk, resident)

    # TODO(synk): if profiling shows exposed patch-tile DMA (small tk), add
    # pipeline_mode=pl.Buffered(3) on the patches BlockSpec.
    return pl.pallas_call(
        kernel,
        out_shape=jax.ShapeDtypeStruct((M, OC_pad), jnp.float32),
        grid_spec=pltpu.PrefetchScalarGridSpec(
            num_scalar_prefetch=0,
            grid=grid,
            in_specs=[
                pl.BlockSpec((tm, tk), lambda j, i, k: (i, k)),
                w_spec,
                pl.BlockSpec((1, tn), lambda j, i, k: (0, j)),
            ],
            out_specs=pl.BlockSpec((tm, tn), lambda j, i, k: (i, j)),
        ),
        compiler_params=pltpu.CompilerParams(
            dimension_semantics=("parallel", "parallel", "arbitrary"),
            vmem_limit_bytes=vmem_limit,
        ),
    )(patches, weight, bias)


# ------------------------------ ReluConv ---------------------------------- #
class ReluConvPallas:
    """Conv2d(in_ch, out_ch, k_size, stride, pad, dilation) followed by ReLU."""

    def __init__(self, in_ch, out_ch, k_size, stride, pad, dilation=1, *,
                 key=None):
        if key is None:
            key = jax.random.PRNGKey(0)
        self.in_ch, self.out_ch = in_ch, out_ch
        self.k_size, self.stride, self.pad, self.dilation = (
            k_size, stride, pad, dilation)
        wk, bk = jax.random.split(key)
        # Deterministic synthetic init (PyTorch-like uniform fan-in bound).
        fan_in = in_ch * k_size * k_size
        bound = 1.0 / np.sqrt(fan_in)
        self.weight = jax.random.uniform(
            wk, (out_ch, in_ch, k_size, k_size), jnp.float32, -bound, bound)
        self.bias = jax.random.uniform(
            bk, (out_ch,), jnp.float32, -bound, bound)

    @functools.partial(jax.jit, static_argnums=0)
    def __call__(self, x):
        # x: (N, C, H, W) float32 (PyTorch layout)
        N = x.shape[0]
        kh = kw = self.k_size
        K = self.in_ch * kh * kw
        # Pad K to 256 when large so tk >= 256 feeds the v6e/v7x MXU depth;
        # small K stays at 128 (also native on v5e).
        K_pad = _round_up(K, 256) if K > 128 else 128
        OC_pad = _round_up(self.out_ch, 128)

        # bf16 BEFORE the patch extraction: halves the HBM traffic of the
        # KH*KW-expanded patches; the kernel accumulates in f32.
        xb = x.astype(jnp.bfloat16)

        # im2col via XLA's patch-extraction conv (identity kernel), emitted
        # directly in NHWC so no wrapper-side transpose of the big patch
        # tensor.  Feature ordering is channel-major (c, kh, kw), matching
        # weight.reshape(out_ch, C*KH*KW).
        # TODO(synk): fully fuse the patch gather into the Pallas kernel with
        # manual make_async_copy DMAs to avoid materializing patches at all.
        patches = lax.conv_general_dilated_patches(
            xb, (kh, kw), (self.stride, self.stride),
            [(self.pad, self.pad), (self.pad, self.pad)],
            rhs_dilation=(self.dilation, self.dilation),
            dimension_numbers=("NCHW", "OIHW", "NHWC"))
        _, OH, OW, _ = patches.shape
        patches = patches.reshape(N * OH * OW, K)
        if K_pad != K:
            patches = jnp.pad(patches, ((0, 0), (0, K_pad - K)))

        # weight (OC, C, KH, KW) f32 -> bf16 (K_pad, OC_pad), matching the
        # patch flatten order, zero-padded to lane/contraction alignment.
        w2d = self.weight.astype(jnp.bfloat16).reshape(self.out_ch, K).T
        if K_pad != K or OC_pad != self.out_ch:
            w2d = jnp.pad(w2d, ((0, K_pad - K), (0, OC_pad - self.out_ch)))
        b2d = self.bias.reshape(1, self.out_ch)
        if OC_pad != self.out_ch:
            b2d = jnp.pad(b2d, ((0, 0), (0, OC_pad - self.out_ch)))

        out = _matmul_bias_relu(patches, w2d, b2d)       # (M, OC_pad) f32
        out = out[:, : self.out_ch]                      # drop padded channels
        out = out.reshape(N, OH, OW, self.out_ch).transpose(0, 3, 1, 2)
        return out                                       # (N, OC, OH, OW)


# ------------------------------ reference --------------------------------- #
def _reference(x, weight, bias, stride, pad, dilation):
    y = lax.conv_general_dilated(
        x, weight,
        window_strides=(stride, stride),
        padding=[(pad, pad), (pad, pad)],
        rhs_dilation=(dilation, dilation),
        dimension_numbers=("NCHW", "OIHW", "NCHW"))
    y = y + bias.reshape(1, -1, 1, 1)
    return jnp.maximum(y, 0.0)


if __name__ == "__main__":
    key = jax.random.PRNGKey(0)
    xkey, pkey = jax.random.split(key)

    N, C, H, W = 2, 4, 16, 16
    out_ch, k_size, stride, pad, dilation = 8, 3, 1, 1, 1

    x = jax.random.normal(xkey, (N, C, H, W), jnp.float32)

    mod = ReluConvPallas(C, out_ch, k_size, stride, pad, dilation, key=pkey)
    y = mod(x)
    jax.block_until_ready(y)

    y_ref = _reference(x, mod.weight, mod.bias, stride, pad, dilation)
    # bf16 MXU inputs (f32 accumulation) -> loosened tolerance vs f32 reference.
    np.testing.assert_allclose(np.asarray(y), np.asarray(y_ref),
                               rtol=2e-2, atol=2e-2)
    print("KERNEL_OK")
</pallas_src>

<mosaic_0001>
module attributes {stable_mosaic.version = 11 : i64} {
  func.func @kernel(%arg0: i32, %arg1: i32, %arg2: i32, %arg3: memref<512x128xbf16, #tpu.memory_space<vmem>>, %arg4: memref<128x128xbf16, #tpu.memory_space<vmem>>, %arg5: memref<1x128xf32, #tpu.memory_space<vmem>>, %arg6: memref<512x128xf32, #tpu.memory_space<vmem>>) attributes {dimension_semantics = [#tpu.dimension_semantics<parallel>, #tpu.dimension_semantics<parallel>, #tpu.dimension_semantics<arbitrary>], iteration_bounds = array<i64: 1, 1, 1>, scalar_prefetch = 0 : i64, scratch_operands = 0 : i64, tpu.core_type = #tpu.core_type<tc>, window_params = [{transform_indices = @transform_0, window_bounds = array<i64: 512, 128>}, {transform_indices = @transform_1, window_bounds = array<i64: 128, 128>}, {transform_indices = @transform_2, window_bounds = array<i64: 1, 128>}, {transform_indices = @transform_3, window_bounds = array<i64: 512, 128>}]} {
    %c0_i32 = arith.constant 0 : i32
    %0 = arith.cmpi eq, %arg2, %c0_i32 : i32
    %1 = arith.extui %0 : i1 to i32
    %c0_i32_0 = arith.constant 0 : i32
    %2 = arith.cmpi ne, %1, %c0_i32_0 : i32
    scf.if %2 {
      %cst_9 = arith.constant 0.000000e+00 : f32
      %15 = vector.broadcast %cst_9 : f32 to vector<512x128xf32>
      %c0_10 = arith.constant 0 : index
      %c0_11 = arith.constant 0 : index
      %16 = vector.load %arg6[%c0_10, %c0_11] : memref<512x128xf32, #tpu.memory_space<vmem>>, vector<512x128xf32>
      tpu.vector_store %arg6[%c0_10, %c0_11], %15 {strides = array<i32>} : memref<512x128xf32, #tpu.memory_space<vmem>>, vector<512x128xf32>,
    } else {
    }
    %c128_i32 = arith.constant 128 : i32
    %3 = arith.muli %arg2, %c128_i32 : i32
    %4 = tpu.assume_multiple %3, 128 : i32
    %5 = arith.index_cast %4 : i32 to index
    %c0 = arith.constant 0 : index
    %6 = vector.load %arg4[%5, %c0] : memref<128x128xbf16, #tpu.memory_space<vmem>>, vector<128x128xbf16>
    %c0_1 = arith.constant 0 : index
    %c0_2 = arith.constant 0 : index
    %7 = vector.load %arg6[%c0_1, %c0_2] : memref<512x128xf32, #tpu.memory_space<vmem>>, vector<512x128xf32>
    %c0_3 = arith.constant 0 : index
    %c0_4 = arith.constant 0 : index
    %8 = vector.load %arg3[%c0_3, %c0_4] : memref<512x128xbf16, #tpu.memory_space<vmem>>, vector<512x128xbf16>
    %cst = arith.constant dense<0.000000e+00> : vector<512x128xf32>
    %9 = tpu.matmul %8, %6, %cst {dimension_numbers = #tpu.dot_dimension_numbers<[1], [0], [0], [1], [0, 0, 1, 1], [], []>} : vector<512x128xbf16>, vector<128x128xbf16>, vector<512x128xf32> -> vector<512x128xf32>
    %10 = arith.addf %7, %9 : vector<512x128xf32>
    %c0_5 = arith.constant 0 : index
    %c0_6 = arith.constant 0 : index
    %11 = vector.load %arg6[%c0_5, %c0_6] : memref<512x128xf32, #tpu.memory_space<vmem>>, vector<512x128xf32>
    tpu.vector_store %arg6[%c0_5, %c0_6], %10 {strides = array<i32>} : memref<512x128xf32, #tpu.memory_space<vmem>>, vector<512x128xf32>,
    %c0_i32_7 = arith.constant 0 : i32
    %12 = arith.cmpi eq, %arg2, %c0_i32_7 : i32
    %13 = arith.extui %12 : i1 to i32
    %c0_i32_8 = arith.constant 0 : i32
    %14 = arith.cmpi ne, %13, %c0_i32_8 : i32
    scf.if %14 {
      %c0_9 = arith.constant 0 : index
      %c0_10 = arith.constant 0 : index
      %15 = vector.load %arg6[%c0_9, %c0_10] : memref<512x128xf32, #tpu.memory_space<vmem>>, vector<512x128xf32>
      %c0_11 = arith.constant 0 : index
      %c0_12 = arith.constant 0 : index
      %16 = vector.load %arg5[%c0_11, %c0_12] : memref<1x128xf32, #tpu.memory_space<vmem>>, vector<1x128xf32>
      %17 = vector.broadcast %16 : vector<1x128xf32> to vector<512x128xf32>
      %18 = arith.addf %15, %17 : vector<512x128xf32>
      %cst_13 = arith.constant 0.000000e+00 : f32
      %19 = vector.broadcast %cst_13 : f32 to vector<512x128xf32>
      %20 = arith.maximumf %18, %19 : vector<512x128xf32>
      %c0_14 = arith.constant 0 : index
      %c0_15 = arith.constant 0 : index
      %21 = vector.load %arg6[%c0_14, %c0_15] : memref<512x128xf32, #tpu.memory_space<vmem>>, vector<512x128xf32>
      tpu.vector_store %arg6[%c0_14, %c0_15], %20 {strides = array<i32>} : memref<512x128xf32, #tpu.memory_space<vmem>>, vector<512x128xf32>,
    } else {
    }
    return
  }
  func.func @transform_0(%arg0: i32, %arg1: i32, %arg2: i32) -> (i32, i32) {
    %c0_i32 = arith.constant 0 : i32
    return %arg1, %arg2 : i32, i32
  }
  func.func @transform_1(%arg0: i32, %arg1: i32, %arg2: i32) -> (i32, i32) {
    %c0_i32 = arith.constant 0 : i32
    %c0_i32_0 = arith.constant 0 : i32
    return %c0_i32, %arg0 : i32, i32
  }
  func.func @transform_2(%arg0: i32, %arg1: i32, %arg2: i32) -> (i32, i32) {
    %c0_i32 = arith.constant 0 : i32
    %c0_i32_0 = arith.constant 0 : i32
    return %c0_i32, %arg0 : i32, i32
  }
  func.func @transform_3(%arg0: i32, %arg1: i32, %arg2: i32) -> (i32, i32) {
    %c0_i32 = arith.constant 0 : i32
    return %arg1, %arg0 : i32, i32
  }
}

</mosaic_0001>

<llo_original>
// kernel: a_call__.1
$region0: #{a_call__.1}
  #allocation0 [shape = 'u32[]', space=smem, size = 0x4, offset = 0x4, fixed_abs, tag = 'smem constant byte address 0x4 - core index']
  #allocation1 [shape = 'u32[72,128]{1,0:T(1,128)}', space=vmem, size = 0x9000, scoped, tag = 'internal scratch']
  %s0 = inlined_call_operand.vmem [shape: bf16[512,128], index: 0, kind: input, shape index: {}]
  %s1 = inlined_call_operand.vmem [shape: bf16[128,128], index: 1, kind: input, shape index: {}]
  %s2 = inlined_call_operand.vmem [shape: f32[1,128], index: 2, kind: input, shape index: {}]
  %s3 = inlined_call_operand.vmem [shape: f32[512,128], index: 3, kind: output, shape index: {}]
  %s4 = sld [smem:[#allocation0]]
  $region30: #{a_call__.1} parent=0
    _
  %s6 = ssub.s32 1, %s4
  %s7 = scalar_select 0, %s6, %s4
  // Predicated region
  $region2: #{a_call__.1} parent=0 // pred_check
    _
  $region3: #{a_call__.1} parent=0 // pred_check_branch
    %9 = sbr.rel (0) target = $region5
  $region4: #{a_call__.1} parent=0 // pred_region
    _
  $region5: #{a_call__.1} parent=0 // pred_fallthru
    _
  // Predicated region
  $region6: #{a_call__.1} parent=0 // pred_check
    _
  $region7: #{a_call__.1} parent=0 // pred_check_branch
    %11 = sbr.rel (0) target = $region9
  $region8: #{a_call__.1} parent=0 // pred_region
    _
  $region9: #{a_call__.1} parent=0 // pred_fallthru
    _
  // Predicated region
  $region10: #{a_call__.1} parent=0 // pred_check
    _
  $region11: #{a_call__.1} parent=0 // pred_check_branch
    %13 = sbr.rel (0) target = $region13
  $region12: #{a_call__.1} parent=0 // pred_region
    _
  $region13: #{a_call__.1} parent=0 // pred_fallthru
    _
  %p14 = scmp.eq.s32.totalorder 0, 0
  // Predicated region
  $region14: #{a_call__.1} parent=0 // pred_check
    %p15 = pneg %p14
  $region15: #{a_call__.1} parent=0 // pred_check_branch
    %17 = sbr.rel (%p15) target = $region17
  $region16: #{a_call__.1} parent=0 // pred_region
    %18 = vst [vmem:[%s3] sm:$0xff] 0.0
    %19 = vst [vmem:[%s3 + $0x8] sm:$0xff] 0.0
    %20 = vst [vmem:[%s3 + $0x10] sm:$0xff] 0.0
    %21 = vst [vmem:[%s3 + $0x18] sm:$0xff] 0.0
    %22 = vst [vmem:[%s3 + $0x20] sm:$0xff] 0.0
    %23 = vst [vmem:[%s3 + $0x28] sm:$0xff] 0.0
    %24 = vst [vmem:[%s3 + $0x30] sm:$0xff] 0.0
    %25 = vst [vmem:[%s3 + $0x38] sm:$0xff] 0.0
    %26 = vst [vmem:[%s3 + $0x40] sm:$0xff] 0.0
    %27 = vst [vmem:[%s3 + $0x48] sm:$0xff] 0.0
    %28 = vst [vmem:[%s3 + $0x50] sm:$0xff] 0.0
    %29 = vst [vmem:[%s3 + $0x58] sm:$0xff] 0.0
    %30 = vst [vmem:[%s3 + $0x60] sm:$0xff] 0.0
    %31 = vst [vmem:[%s3 + $0x68] sm:$0xff] 0.0
    %32 = vst [vmem:[%s3 + $0x70] sm:$0xff] 0.0
    %33 = vst [vmem:[%s3 + $0x78] sm:$0xff] 0.0
    %34 = vst [vmem:[%s3 + $0x80] sm:$0xff] 0.0
    %35 = vst [vmem:[%s3 + $0x88] sm:$0xff] 0.0
    %36 = vst [vmem:[%s3 + $0x90] sm:$0xff] 0.0
    %37 = vst [vmem:[%s3 + $0x98] sm:$0xff] 0.0
    %38 = vst [vmem:[%s3 + $0xa0] sm:$0xff] 0.0
    %39 = vst [vmem:[%s3 + $0xa8] sm:$0xff] 0.0
    %40 = vst [vmem:[%s3 + $0xb0] sm:$0xff] 0.0
    %41 = vst [vmem:[%s3 + $0xb8] sm:$0xff] 0.0
    %42 = vst [vmem:[%s3 + $0xc0] sm:$0xff] 0.0
    %43 = vst [vmem:[%s3 + $0xc8] sm:$0xff] 0.0
    %44 = vst [vmem:[%s3 + $0xd0] sm:$0xff] 0.0
    %45 = vst [vmem:[%s3 + $0xd8] sm:$0xff] 0.0
    %46 = vst [vmem:[%s3 + $0xe0] sm:$0xff] 0.0
    %47 = vst [vmem:[%s3 + $0xe8] sm:$0xff] 0.0
    %48 = vst [vmem:[%s3 + $0xf0] sm:$0xff] 0.0
    %49 = vst [vmem:[%s3 + $0xf8] sm:$0xff] 0.0
    %50 = vst [vmem:[%s3 + $0x100] sm:$0xff] 0.0
    %51 = vst [vmem:[%s3 + $0x108] sm:$0xff] 0.0
    %52 = vst [vmem:[%s3 + $0x110] sm:$0xff] 0.0
    %53 = vst [vmem:[%s3 + $0x118] sm:$0xff] 0.0
    %54 = vst [vmem:[%s3 + $0x120] sm:$0xff] 0.0
    %55 = vst [vmem:[%s3 + $0x128] sm:$0xff] 0.0
    %56 = vst [vmem:[%s3 + $0x130] sm:$0xff] 0.0
    %57 = vst [vmem:[%s3 + $0x138] sm:$0xff] 0.0
    %58 = vst [vmem:[%s3 + $0x140] sm:$0xff] 0.0
    %59 = vst [vmem:[%s3 + $0x148] sm:$0xff] 0.0
    %60 = vst [vmem:[%s3 + $0x150] sm:$0xff] 0.0
    %61 = vst [vmem:[%s3 + $0x158] sm:$0xff] 0.0
    %62 = vst [vmem:[%s3 + $0x160] sm:$0xff] 0.0
    %63 = vst [vmem:[%s3 + $0x168] sm:$0xff] 0.0
    %64 = vst [vmem:[%s3 + $0x170] sm:$0xff] 0.0
    %65 = vst [vmem:[%s3 + $0x178] sm:$0xff] 0.0
    %66 = vst [vmem:[%s3 + $0x180] sm:$0xff] 0.0
    %67 = vst [vmem:[%s3 + $0x188] sm:$0xff] 0.0
    %68 = vst [vmem:[%s3 + $0x190] sm:$0xff] 0.0
    %69 = vst [vmem:[%s3 + $0x198] sm:$0xff] 0.0
    %70 = vst [vmem:[%s3 + $0x1a0] sm:$0xff] 0.0
    %71 = vst [vmem:[%s3 + $0x1a8] sm:$0xff] 0.0
    %72 = vst [vmem:[%s3 + $0x1b0] sm:$0xff] 0.0
    %73 = vst [vmem:[%s3 + $0x1b8] sm:$0xff] 0.0
    %74 = vst [vmem:[%s3 + $0x1c0] sm:$0xff] 0.0
    %75 = vst [vmem:[%s3 + $0x1c8] sm:$0xff] 0.0
    %76 = vst [vmem:[%s3 + $0x1d0] sm:$0xff] 0.0
    %77 = vst [vmem:[%s3 + $0x1d8] sm:$0xff] 0.0
    %78 = vst [vmem:[%s3 + $0x1e0] sm:$0xff] 0.0
    %79 = vst [vmem:[%s3 + $0x1e8] sm:$0xff] 0.0
    %80 = vst [vmem:[%s3 + $0x1f0] sm:$0xff] 0.0
    %81 = vst [vmem:[%s3 + $0x1f8] sm:$0xff] 0.0
  $region17: #{a_call__.1} parent=0 // pred_fallthru
    _
  %s82 = smul.u32 0, 128
  %s83 = sshra.s32 %s82, 3
  %s84 = sand.u32 %s82, 7
  %s85 = smul.addr %s83, 4
  %s86 = scalar_lea.vmem %s1, %s85
  %v87 = vld [vmem:[%s86] sm:$0xf]
  %v88 = vld [vmem:[%s86 + $0x4] sm:$0xf]
  %v89 = vld [vmem:[%s86 + $0x8] sm:$0xf]
  %v90 = vld [vmem:[%s86 + $0xc] sm:$0xf]
  %v91 = vld [vmem:[%s86 + $0x10] sm:$0xf]
  %v92 = vld [vmem:[%s86 + $0x14] sm:$0xf]
  %v93 = vld [vmem:[%s86 + $0x18] sm:$0xf]
  %v94 = vld [vmem:[%s86 + $0x1c] sm:$0xf]
  %v95 = vld [vmem:[%s86 + $0x20] sm:$0xf]
  %v96 = vld [vmem:[%s86 + $0x24] sm:$0xf]
  %v97 = vld [vmem:[%s86 + $0x28] sm:$0xf]
  %v98 = vld [vmem:[%s86 + $0x2c] sm:$0xf]
  %v99 = vld [vmem:[%s86 + $0x30] sm:$0xf]
  %v100 = vld [vmem:[%s86 + $0x34] sm:$0xf]
  %v101 = vld [vmem:[%s86 + $0x38] sm:$0xf]
  %v102 = vld [vmem:[%s86 + $0x3c] sm:$0xf]
  %v103 = vld [vmem:[%s3] sm:$0xff]
  %v104 = vld [vmem:[%s3 + $0x8] sm:$0xff]
  %v105 = vld [vmem:[%s3 + $0x10] sm:$0xff]
  %v106 = vld [vmem:[%s3 + $0x18] sm:$0xff]
  %v107 = vld [vmem:[%s3 + $0x20] sm:$0xff]
  %v108 = vld [vmem:[%s3 + $0x28] sm:$0xff]
  %v109 = vld [vmem:[%s3 + $0x30] sm:$0xff]
  %v110 = vld [vmem:[%s3 + $0x38] sm:$0xff]
  %v111 = vld [vmem:[%s3 + $0x40] sm:$0xff]
  %v112 = vld [vmem:[%s3 + $0x48] sm:$0xff]
  %v113 = vld [vmem:[%s3 + $0x50] sm:$0xff]
  %v114 = vld [vmem:[%s3 + $0x58] sm:$0xff]
  %v115 = vld [vmem:[%s3 + $0x60] sm:$0xff]
  %v116 = vld [vmem:[%s3 + $0x68] sm:$0xff]
  %v117 = vld [vmem:[%s3 + $0x70] sm:$0xff]
  %v118 = vld [vmem:[%s3 + $0x78] sm:$0xff]
  %v119 = vld [vmem:[%s3 + $0x80] sm:$0xff]
  %v120 = vld [vmem:[%s3 + $0x88] sm:$0xff]
  %v121 = vld [vmem:[%s3 + $0x90] sm:$0xff]
  %v122 = vld [vmem:[%s3 + $0x98] sm:$0xff]
  %v123 = vld [vmem:[%s3 + $0xa0] sm:$0xff]
  %v124 = vld [vmem:[%s3 + $0xa8] sm:$0xff]
  %v125 = vld [vmem:[%s3 + $0xb0] sm:$0xff]
  %v126 = vld [vmem:[%s3 + $0xb8] sm:$0xff]
  %v127 = vld [vmem:[%s3 + $0xc0] sm:$0xff]
  %v128 = vld [vmem:[%s3 + $0xc8] sm:$0xff]
  %v129 = vld [vmem:[%s3 + $0xd0] sm:$0xff]
  %v130 = vld [vmem:[%s3 + $0xd8] sm:$0xff]
  %v131 = vld [vmem:[%s3 + $0xe0] sm:$0xff]
  %v132 = vld [vmem:[%s3 + $0xe8] sm:$0xff]
  %v133 = vld [vmem:[%s3 + $0xf0] sm:$0xff]
  %v134 = vld [vmem:[%s3 + $0xf8] sm:$0xff]
  %v135 = vld [vmem:[%s3 + $0x100] sm:$0xff]
  %v136 = vld [vmem:[%s3 + $0x108] sm:$0xff]
  %v137 = vld [vmem:[%s3 + $0x110] sm:$0xff]
  %v138 = vld [vmem:[%s3 + $0x118] sm:$0xff]
  %v139 = vld [vmem:[%s3 + $0x120] sm:$0xff]
  %v140 = vld [vmem:[%s3 + $0x128] sm:$0xff]
  %v141 = vld [vmem:[%s3 + $0x130] sm:$0xff]
  %v142 = vld [vmem:[%s3 + $0x138] sm:$0xff]
  %v143 = vld [vmem:[%s3 + $0x140] sm:$0xff]
  %v144 = vld [vmem:[%s3 + $0x148] sm:$0xff]
  %v145 = vld [vmem:[%s3 + $0x150] sm:$0xff]
  %v146 = vld [vmem:[%s3 + $0x158] sm:$0xff]
  %v147 = vld [vmem:[%s3 + $0x160] sm:$0xff]
  %v148 = vld [vmem:[%s3 + $0x168] sm:$0xff]
  %v149 = vld [vmem:[%s3 + $0x170] sm:$0xff]
  %v150 = vld [vmem:[%s3 + $0x178] sm:$0xff]
  %v151 = vld [vmem:[%s3 + $0x180] sm:$0xff]
  %v152 = vld [vmem:[%s3 + $0x188] sm:$0xff]
  %v153 = vld [vmem:[%s3 + $0x190] sm:$0xff]
  %v154 = vld [vmem:[%s3 + $0x198] sm:$0xff]
  %v155 = vld [vmem:[%s3 + $0x1a0] sm:$0xff]
  %v156 = vld [vmem:[%s3 + $0x1a8] sm:$0xff]
  %v157 = vld [vmem:[%s3 + $0x1b0] sm:$0xff]
  %v158 = vld [vmem:[%s3 + $0x1b8] sm:$0xff]
  %v159 = vld [vmem:[%s3 + $0x1c0] sm:$0xff]
  %v160 = vld [vmem:[%s3 + $0x1c8] sm:$0xff]
  %v161 = vld [vmem:[%s3 + $0x1d0] sm:$0xff]
  %v162 = vld [vmem:[%s3 + $0x1d8] sm:$0xff]
  %v163 = vld [vmem:[%s3 + $0x1e0] sm:$0xff]
  %v164 = vld [vmem:[%s3 + $0x1e8] sm:$0xff]
  %v165 = vld [vmem:[%s3 + $0x1f0] sm:$0xff]
  %v166 = vld [vmem:[%s3 + $0x1f8] sm:$0xff]
  %v167 = vld [vmem:[%s0] sm:$0xf]
  %v168 = vld [vmem:[%s0 + $0x4] sm:$0xf]
  %v169 = vld [vmem:[%s0 + $0x8] sm:$0xf]
  %v170 = vld [vmem:[%s0 + $0xc] sm:$0xf]
  %v171 = vld [vmem:[%s0 + $0x10] sm:$0xf]
  %v172 = vld [vmem:[%s0 + $0x14] sm:$0xf]
  %v173 = vld [vmem:[%s0 + $0x18] sm:$0xf]
  %v174 = vld [vmem:[%s0 + $0x1c] sm:$0xf]
  %v175 = vld [vmem:[%s0 + $0x20] sm:$0xf]
  %v176 = vld [vmem:[%s0 + $0x24] sm:$0xf]
  %v177 = vld [vmem:[%s0 + $0x28] sm:$0xf]
  %v178 = vld [vmem:[%s0 + $0x2c] sm:$0xf]
  %v179 = vld [vmem:[%s0 + $0x30] sm:$0xf]
  %v180 = vld [vmem:[%s0 + $0x34] sm:$0xf]
  %v181 = vld [vmem:[%s0 + $0x38] sm:$0xf]
  %v182 = vld [vmem:[%s0 + $0x3c] sm:$0xf]
  %v183 = vld [vmem:[%s0 + $0x40] sm:$0xf]
  %v184 = vld [vmem:[%s0 + $0x44] sm:$0xf]
  %v185 = vld [vmem:[%s0 + $0x48] sm:$0xf]
  %v186 = vld [vmem:[%s0 + $0x4c] sm:$0xf]
  %v187 = vld [vmem:[%s0 + $0x50] sm:$0xf]
  %v188 = vld [vmem:[%s0 + $0x54] sm:$0xf]
  %v189 = vld [vmem:[%s0 + $0x58] sm:$0xf]
  %v190 = vld [vmem:[%s0 + $0x5c] sm:$0xf]
  %v191 = vld [vmem:[%s0 + $0x60] sm:$0xf]
  %v192 = vld [vmem:[%s0 + $0x64] sm:$0xf]
  %v193 = vld [vmem:[%s0 + $0x68] sm:$0xf]
  %v194 = vld [vmem:[%s0 + $0x6c] sm:$0xf]
  %v195 = vld [vmem:[%s0 + $0x70] sm:$0xf]
  %v196 = vld [vmem:[%s0 + $0x74] sm:$0xf]
  %v197 = vld [vmem:[%s0 + $0x78] sm:$0xf]
  %v198 = vld [vmem:[%s0 + $0x7c] sm:$0xf]
  %v199 = vld [vmem:[%s0 + $0x80] sm:$0xf]
  %v200 = vld [vmem:[%s0 + $0x84] sm:$0xf]
  %v201 = vld [vmem:[%s0 + $0x88] sm:$0xf]
  %v202 = vld [vmem:[%s0 + $0x8c] sm:$0xf]
  %v203 = vld [vmem:[%s0 + $0x90] sm:$0xf]
  %v204 = vld [vmem:[%s0 + $0x94] sm:$0xf]
  %v205 = vld [vmem:[%s0 + $0x98] sm:$0xf]
  %v206 = vld [vmem:[%s0 + $0x9c] sm:$0xf]
  %v207 = vld [vmem:[%s0 + $0xa0] sm:$0xf]
  %v208 = vld [vmem:[%s0 + $0xa4] sm:$0xf]
  %v209 = vld [vmem:[%s0 + $0xa8] sm:$0xf]
  %v210 = vld [vmem:[%s0 + $0xac] sm:$0xf]
  %v211 = vld [vmem:[%s0 + $0xb0] sm:$0xf]
  %v212 = vld [vmem:[%s0 + $0xb4] sm:$0xf]
  %v213 = vld [vmem:[%s0 + $0xb8] sm:$0xf]
  %v214 = vld [vmem:[%s0 + $0xbc] sm:$0xf]
  %v215 = vld [vmem:[%s0 + $0xc0] sm:$0xf]
  %v216 = vld [vmem:[%s0 + $0xc4] sm:$0xf]
  %v217 = vld [vmem:[%s0 + $0xc8] sm:$0xf]
  %v218 = vld [vmem:[%s0 + $0xcc] sm:$0xf]
  %v219 = vld [vmem:[%s0 + $0xd0] sm:$0xf]
  %v220 = vld [vmem:[%s0 + $0xd4] sm:$0xf]
  %v221 = vld [vmem:[%s0 + $0xd8] sm:$0xf]
  %v222 = vld [vmem:[%s0 + $0xdc] sm:$0xf]
  %v223 = vld [vmem:[%s0 + $0xe0] sm:$0xf]
  %v224 = vld [vmem:[%s0 + $0xe4] sm:$0xf]
  %v225 = vld [vmem:[%s0 + $0xe8] sm:$0xf]
  %v226 = vld [vmem:[%s0 + $0xec] sm:$0xf]
  %v227 = vld [vmem:[%s0 + $0xf0] sm:$0xf]
  %v228 = vld [vmem:[%s0 + $0xf4] sm:$0xf]
  %v229 = vld [vmem:[%s0 + $0xf8] sm:$0xf]
  %v230 = vld [vmem:[%s0 + $0xfc] sm:$0xf]
  %v295 = vunpack.c.l.b16 %v167
  %v296 = vunpack.c.l.b16 %v168
  %v297 = vunpack.c.l.b16 %v169
  %v298 = vunpack.c.l.b16 %v170
  %v299 = vunpack.c.l.b16 %v171
  %v300 = vunpack.c.l.b16 %v172
  %v301 = vunpack.c.l.b16 %v173
  %v302 = vunpack.c.l.b16 %v174
  %v303 = vunpack.c.l.b16 %v175
  %v304 = vunpack.c.l.b16 %v176
  %v305 = vunpack.c.l.b16 %v177
  %v306 = vunpack.c.l.b16 %v178
  %v307 = vunpack.c.l.b16 %v179
  %v308 = vunpack.c.l.b16 %v180
  %v309 = vunpack.c.l.b16 %v181
  %v310 = vunpack.c.l.b16 %v182
  %v311 = vunpack.c.l.b16 %v183
  %v312 = vunpack.c.l.b16 %v184
  %v313 = vunpack.c.l.b16 %v185
  %v314 = vunpack.c.l.b16 %v186
  %v315 = vunpack.c.l.b16 %v187
  %v316 = vunpack.c.l.b16 %v188
  %v317 = vunpack.c.l.b16 %v189
  %v318 = vunpack.c.l.b16 %v190
  %v319 = vunpack.c.l.b16 %v191
  %v320 = vunpack.c.l.b16 %v192
  %v321 = vunpack.c.l.b16 %v193
  %v322 = vunpack.c.l.b16 %v194
  %v323 = vunpack.c.l.b16 %v195
  %v324 = vunpack.c.l.b16 %v196
  %v325 = vunpack.c.l.b16 %v197
  %v326 = vunpack.c.l.b16 %v198
  %v327 = vunpack.c.l.b16 %v199
  %v328 = vunpack.c.l.b16 %v200
  %v329 = vunpack.c.l.b16 %v201
  %v330 = vunpack.c.l.b16 %v202
  %v331 = vunpack.c.l.b16 %v203
  %v332 = vunpack.c.l.b16 %v204
  %v333 = vunpack.c.l.b16 %v205
  %v334 = vunpack.c.l.b16 %v206
  %v335 = vunpack.c.l.b16 %v207
  %v336 = vunpack.c.l.b16 %v208
  %v337 = vunpack.c.l.b16 %v209
  %v338 = vunpack.c.l.b16 %v210
  %v339 = vunpack.c.l.b16 %v211
  %v340 = vunpack.c.l.b16 %v212
  %v341 = vunpack.c.l.b16 %v213
  %v342 = vunpack.c.l.b16 %v214
  %v343 = vunpack.c.l.b16 %v215
  %v344 = vunpack.c.l.b16 %v216
  %v345 = vunpack.c.l.b16 %v217
  %v346 = vunpack.c.l.b16 %v218
  %v347 = vunpack.c.l.b16 %v219
  %v348 = vunpack.c.l.b16 %v220
  %v349 = vunpack.c.l.b16 %v221
  %v350 = vunpack.c.l.b16 %v222
  %v351 = vunpack.c.l.b16 %v223
  %v352 = vunpack.c.l.b16 %v224
  %v353 = vunpack.c.l.b16 %v225
  %v354 = vunpack.c.l.b16 %v226
  %v355 = vunpack.c.l.b16 %v227
  %v356 = vunpack.c.l.b16 %v228
  %v357 = vunpack.c.l.b16 %v229
  %v358 = vunpack.c.l.b16 %v230
  %v359 = vpack.c.b16 %v296, %v295
  %v360 = vpack.c.b16 %v298, %v297
  %v361 = vpack.c.b16 %v300, %v299
  %v362 = vpack.c.b16 %v302, %v301
  %v363 = vpack.c.b16 %v304, %v303
  %v364 = vpack.c.b16 %v306, %v305
  %v365 = vpack.c.b16 %v308, %v307
  %v366 = vpack.c.b16 %v310, %v309
  %v367 = vpack.c.b16 %v312, %v311
  %v368 = vpack.c.b16 %v314, %v313
  %v369 = vpack.c.b16 %v316, %v315
  %v370 = vpack.c.b16 %v318, %v317
  %v371 = vpack.c.b16 %v320, %v319
  %v372 = vpack.c.b16 %v322, %v321
  %v373 = vpack.c.b16 %v324, %v323
  %v374 = vpack.c.b16 %v326, %v325
  %v375 = vpack.c.b16 %v328, %v327
  %v376 = vpack.c.b16 %v330, %v329
  %v377 = vpack.c.b16 %v332, %v331
  %v378 = vpack.c.b16 %v334, %v333
  %v379 = vpack.c.b16 %v336, %v335
  %v380 = vpack.c.b16 %v338, %v337
  %v381 = vpack.c.b16 %v340, %v339
  %v382 = vpack.c.b16 %v342, %v341
  %v383 = vpack.c.b16 %v344, %v343
  %v384 = vpack.c.b16 %v346, %v345
  %v385 = vpack.c.b16 %v348, %v347
  %v386 = vpack.c.b16 %v350, %v349
  %v387 = vpack.c.b16 %v352, %v351
  %v388 = vpack.c.b16 %v354, %v353
  %v389 = vpack.c.b16 %v356, %v355
  %v390 = vpack.c.b16 %v358, %v357
  %v439 = vunpack.c.l.b16 %v87
  %v440 = vunpack.c.l.b16 %v88
  %v441 = vunpack.c.l.b16 %v89
  %v442 = vunpack.c.l.b16 %v90
  %v443 = vunpack.c.l.b16 %v91
  %v444 = vunpack.c.l.b16 %v92
  %v445 = vunpack.c.l.b16 %v93
  %v446 = vunpack.c.l.b16 %v94
  %v447 = vunpack.c.l.b16 %v95
  %v448 = vunpack.c.l.b16 %v96
  %v449 = vunpack.c.l.b16 %v97
  %v450 = vunpack.c.l.b16 %v98
  %v451 = vunpack.c.l.b16 %v99
  %v452 = vunpack.c.l.b16 %v100
  %v453 = vunpack.c.l.b16 %v101
  %v454 = vunpack.c.l.b16 %v102
  %v455 = vpack.c.b16 %v440, %v439
  %v456 = vpack.c.b16 %v442, %v441
  %v457 = vpack.c.b16 %v444, %v443
  %v458 = vpack.c.b16 %v446, %v445
  %v459 = vpack.c.b16 %v448, %v447
  %v460 = vpack.c.b16 %v450, %v449
  %v461 = vpack.c.b16 %v452, %v451
  %v462 = vpack.c.b16 %v454, %v453
  %471 = vmatpush.bf16.msra.mxu0 %v462
  %472 = vmatpush.bf16.msra.mxu0 %v461
  %473 = vmatpush.bf16.msra.mxu0 %v460
  %474 = vmatpush.bf16.msra.mxu0 %v459
  %475 = vmatpush.bf16.msra.mxu0 %v458
  %476 = vmatpush.bf16.msra.mxu0 %v457
  %477 = vmatpush.bf16.msra.mxu0 %v456
  %478 = vmatpush.bf16.msra.mxu0 %v455
  %479 = vmatmul.bf16.gmra.mxu0 %v359
  %v480 = vpop.f32.mrf.mxu0
  %v481 = vadd.f32 0.0, %v480
  %v482 = vpop.f32.mrf.mxu0
  %v483 = vadd.f32 0.0, %v482
  %484 = vmatmul.bf16.gmra.mxu0 %v360
  %v485 = vpop.f32.mrf.mxu0
  %v486 = vadd.f32 0.0, %v485
  %v487 = vpop.f32.mrf.mxu0
  %v488 = vadd.f32 0.0, %v487
  %489 = vmatmul.bf16.gmra.mxu0 %v361
  %v490 = vpop.f32.mrf.mxu0
  %v491 = vadd.f32 0.0, %v490
  %v492 = vpop.f32.mrf.mxu0
  %v493 = vadd.f32 0.0, %v492
  %494 = vmatmul.bf16.gmra.mxu0 %v362
  %v495 = vpop.f32.mrf.mxu0
  %v496 = vadd.f32 0.0, %v495
  %v497 = vpop.f32.mrf.mxu0
  %v498 = vadd.f32 0.0, %v497
  %499 = vmatmul.bf16.gmra.mxu0 %v363
  %v500 = vpop.f32.mrf.mxu0
  %v501 = vadd.f32 0.0, %v500
  %v502 = vpop.f32.mrf.mxu0
  %v503 = vadd.f32 0.0, %v502
  %504 = vmatmul.bf16.gmra.mxu0 %v364
  %v505 = vpop.f32.mrf.mxu0
  %v506 = vadd.f32 0.0, %v505
  %v507 = vpop.f32.mrf.mxu0
  %v508 = vadd.f32 0.0, %v507
  %509 = vmatmul.bf16.gmra.mxu0 %v365
  %v510 = vpop.f32.mrf.mxu0
  %v511 = vadd.f32 0.0, %v510
  %v512 = vpop.f32.mrf.mxu0
  %v513 = vadd.f32 0.0, %v512
  %514 = vmatmul.bf16.gmra.mxu0 %v366
  %v515 = vpop.f32.mrf.mxu0
  %v516 = vadd.f32 0.0, %v515
  %v517 = vpop.f32.mrf.mxu0
  %v518 = vadd.f32 0.0, %v517
  %519 = vmatmul.bf16.gmra.mxu0 %v367
  %v520 = vpop.f32.mrf.mxu0
  %v521 = vadd.f32 0.0, %v520
  %v522 = vpop.f32.mrf.mxu0
  %v523 = vadd.f32 0.0, %v522
  %524 = vmatmul.bf16.gmra.mxu0 %v368
  %v525 = vpop.f32.mrf.mxu0
  %v526 = vadd.f32 0.0, %v525
  %v527 = vpop.f32.mrf.mxu0
  %v528 = vadd.f32 0.0, %v527
  %529 = vmatmul.bf16.gmra.mxu0 %v369
  %v530 = vpop.f32.mrf.mxu0
  %v531 = vadd.f32 0.0, %v530
  %v532 = vpop.f32.mrf.mxu0
  %v533 = vadd.f32 0.0, %v532
  %534 = vmatmul.bf16.gmra.mxu0 %v370
  %v535 = vpop.f32.mrf.mxu0
  %v536 = vadd.f32 0.0, %v535
  %v537 = vpop.f32.mrf.mxu0
  %v538 = vadd.f32 0.0, %v537
  %539 = vmatmul.bf16.gmra.mxu0 %v371
  %v540 = vpop.f32.mrf.mxu0
  %v541 = vadd.f32 0.0, %v540
  %v542 = vpop.f32.mrf.mxu0
  %v543 = vadd.f32 0.0, %v542
  %544 = vmatmul.bf16.gmra.mxu0 %v372
  %v545 = vpop.f32.mrf.mxu0
  %v546 = vadd.f32 0.0, %v545
  %v547 = vpop.f32.mrf.mxu0
  %v548 = vadd.f32 0.0, %v547
  %549 = vmatmul.bf16.gmra.mxu0 %v373
  %v550 = vpop.f32.mrf.mxu0
  %v551 = vadd.f32 0.0, %v550
  %v552 = vpop.f32.mrf.mxu0
  %v553 = vadd.f32 0.0, %v552
  %554 = vmatmul.bf16.gmra.mxu0 %v374
  %v555 = vpop.f32.mrf.mxu0
  %v556 = vadd.f32 0.0, %v555
  %v557 = vpop.f32.mrf.mxu0
  %v558 = vadd.f32 0.0, %v557
  %559 = vmatmul.bf16.gmra.mxu0 %v375
  %v560 = vpop.f32.mrf.mxu0
  %v561 = vadd.f32 0.0, %v560
  %v562 = vpop.f32.mrf.mxu0
  %v563 = vadd.f32 0.0, %v562
  %564 = vmatmul.bf16.gmra.mxu0 %v376
  %v565 = vpop.f32.mrf.mxu0
  %v566 = vadd.f32 0.0, %v565
  %v567 = vpop.f32.mrf.mxu0
  %v568 = vadd.f32 0.0, %v567
  %569 = vmatmul.bf16.gmra.mxu0 %v377
  %v570 = vpop.f32.mrf.mxu0
  %v571 = vadd.f32 0.0, %v570
  %v572 = vpop.f32.mrf.mxu0
  %v573 = vadd.f32 0.0, %v572
  %574 = vmatmul.bf16.gmra.mxu0 %v378
  %v575 = vpop.f32.mrf.mxu0
  %v576 = vadd.f32 0.0, %v575
  %v577 = vpop.f32.mrf.mxu0
  %v578 = vadd.f32 0.0, %v577
  %579 = vmatmul.bf16.gmra.mxu0 %v379
  %v580 = vpop.f32.mrf.mxu0
  %v581 = vadd.f32 0.0, %v580
  %v582 = vpop.f32.mrf.mxu0
  %v583 = vadd.f32 0.0, %v582
  %584 = vmatmul.bf16.gmra.mxu0 %v380
  %v585 = vpop.f32.mrf.mxu0
  %v586 = vadd.f32 0.0, %v585
  %v587 = vpop.f32.mrf.mxu0
  %v588 = vadd.f32 0.0, %v587
  %589 = vmatmul.bf16.gmra.mxu0 %v381
  %v590 = vpop.f32.mrf.mxu0
  %v591 = vadd.f32 0.0, %v590
  %v592 = vpop.f32.mrf.mxu0
  %v593 = vadd.f32 0.0, %v592
  %594 = vmatmul.bf16.gmra.mxu0 %v382
  %v595 = vpop.f32.mrf.mxu0
  %v596 = vadd.f32 0.0, %v595
  %v597 = vpop.f32.mrf.mxu0
  %v598 = vadd.f32 0.0, %v597
  %599 = vmatmul.bf16.gmra.mxu0 %v383
  %v600 = vpop.f32.mrf.mxu0
  %v601 = vadd.f32 0.0, %v600
  %v602 = vpop.f32.mrf.mxu0
  %v603 = vadd.f32 0.0, %v602
  %604 = vmatmul.bf16.gmra.mxu0 %v384
  %v605 = vpop.f32.mrf.mxu0
  %v606 = vadd.f32 0.0, %v605
  %v607 = vpop.f32.mrf.mxu0
  %v608 = vadd.f32 0.0, %v607
  %609 = vmatmul.bf16.gmra.mxu0 %v385
  %v610 = vpop.f32.mrf.mxu0
  %v611 = vadd.f32 0.0, %v610
  %v612 = vpop.f32.mrf.mxu0
  %v613 = vadd.f32 0.0, %v612
  %614 = vmatmul.bf16.gmra.mxu0 %v386
  %v615 = vpop.f32.mrf.mxu0
  %v616 = vadd.f32 0.0, %v615
  %v617 = vpop.f32.mrf.mxu0
  %v618 = vadd.f32 0.0, %v617
  %619 = vmatmul.bf16.gmra.mxu0 %v387
  %v620 = vpop.f32.mrf.mxu0
  %v621 = vadd.f32 0.0, %v620
  %v622 = vpop.f32.mrf.mxu0
  %v623 = vadd.f32 0.0, %v622
  %624 = vmatmul.bf16.gmra.mxu0 %v388
  %v625 = vpop.f32.mrf.mxu0
  %v626 = vadd.f32 0.0, %v625
  %v627 = vpop.f32.mrf.mxu0
  %v628 = vadd.f32 0.0, %v627
  %629 = vmatmul.bf16.gmra.mxu0 %v389
  %v630 = vpop.f32.mrf.mxu0
  %v631 = vadd.f32 0.0, %v630
  %v632 = vpop.f32.mrf.mxu0
  %v633 = vadd.f32 0.0, %v632
  %634 = vmatmul.bf16.gmra.mxu0 %v390
  %v635 = vpop.f32.mrf.mxu0
  %v636 = vadd.f32 0.0, %v635
  %v637 = vpop.f32.mrf.mxu0
  %v638 = vadd.f32 0.0, %v637
  %639 = vdwg.mxu0
  %v640 = vadd.f32 %v103, %v481
  %v641 = vadd.f32 %v104, %v483
  %v642 = vadd.f32 %v105, %v486
  %v643 = vadd.f32 %v106, %v488
  %v644 = vadd.f32 %v107, %v491
  %v645 = vadd.f32 %v108, %v493
  %v646 = vadd.f32 %v109, %v496
  %v647 = vadd.f32 %v110, %v498
  %v648 = vadd.f32 %v111, %v501
  %v649 = vadd.f32 %v112, %v503
  %v650 = vadd.f32 %v113, %v506
  %v651 = vadd.f32 %v114, %v508
  %v652 = vadd.f32 %v115, %v511
  %v653 = vadd.f32 %v116, %v513
  %v654 = vadd.f32 %v117, %v516
  %v655 = vadd.f32 %v118, %v518
  %v656 = vadd.f32 %v119, %v521
  %v657 = vadd.f32 %v120, %v523
  %v658 = vadd.f32 %v121, %v526
  %v659 = vadd.f32 %v122, %v528
  %v660 = vadd.f32 %v123, %v531
  %v661 = vadd.f32 %v124, %v533
  %v662 = vadd.f32 %v125, %v536
  %v663 = vadd.f32 %v126, %v538
  %v664 = vadd.f32 %v127, %v541
  %v665 = vadd.f32 %v128, %v543
  %v666 = vadd.f32 %v129, %v546
  %v667 = vadd.f32 %v130, %v548
  %v668 = vadd.f32 %v131, %v551
  %v669 = vadd.f32 %v132, %v553
  %v670 = vadd.f32 %v133, %v556
  %v671 = vadd.f32 %v134, %v558
  %v672 = vadd.f32 %v135, %v561
  %v673 = vadd.f32 %v136, %v563
  %v674 = vadd.f32 %v137, %v566
  %v675 = vadd.f32 %v138, %v568
  %v676 = vadd.f32 %v139, %v571
  %v677 = vadd.f32 %v140, %v573
  %v678 = vadd.f32 %v141, %v576
  %v679 = vadd.f32 %v142, %v578
  %v680 = vadd.f32 %v143, %v581
  %v681 = vadd.f32 %v144, %v583
  %v682 = vadd.f32 %v145, %v586
  %v683 = vadd.f32 %v146, %v588
  %v684 = vadd.f32 %v147, %v591
  %v685 = vadd.f32 %v148, %v593
  %v686 = vadd.f32 %v149, %v596
  %v687 = vadd.f32 %v150, %v598
  %v688 = vadd.f32 %v151, %v601
  %v689 = vadd.f32 %v152, %v603
  %v690 = vadd.f32 %v153, %v606
  %v691 = vadd.f32 %v154, %v608
  %v692 = vadd.f32 %v155, %v611
  %v693 = vadd.f32 %v156, %v613
  %v694 = vadd.f32 %v157, %v616
  %v695 = vadd.f32 %v158, %v618
  %v696 = vadd.f32 %v159, %v621
  %v697 = vadd.f32 %v160, %v623
  %v698 = vadd.f32 %v161, %v626
  %v699 = vadd.f32 %v162, %v628
  %v700 = vadd.f32 %v163, %v631
  %v701 = vadd.f32 %v164, %v633
  %v702 = vadd.f32 %v165, %v636
  %v703 = vadd.f32 %v166, %v638
  %704 = vst [vmem:[%s3] sm:$0xff] %v640
  %705 = vst [vmem:[%s3 + $0x8] sm:$0xff] %v641
  %706 = vst [vmem:[%s3 + $0x10] sm:$0xff] %v642
  %707 = vst [vmem:[%s3 + $0x18] sm:$0xff] %v643
  %708 = vst [vmem:[%s3 + $0x20] sm:$0xff] %v644
  %709 = vst [vmem:[%s3 + $0x28] sm:$0xff] %v645
  %710 = vst [vmem:[%s3 + $0x30] sm:$0xff] %v646
  %711 = vst [vmem:[%s3 + $0x38] sm:$0xff] %v647
  %712 = vst [vmem:[%s3 + $0x40] sm:$0xff] %v648
  %713 = vst [vmem:[%s3 + $0x48] sm:$0xff] %v649
  %714 = vst [vmem:[%s3 + $0x50] sm:$0xff] %v650
  %715 = vst [vmem:[%s3 + $0x58] sm:$0xff] %v651
  %716 = vst [vmem:[%s3 + $0x60] sm:$0xff] %v652
  %717 = vst [vmem:[%s3 + $0x68] sm:$0xff] %v653
  %718 = vst [vmem:[%s3 + $0x70] sm:$0xff] %v654
  %719 = vst [vmem:[%s3 + $0x78] sm:$0xff] %v655
  %720 = vst [vmem:[%s3 + $0x80] sm:$0xff] %v656
  %721 = vst [vmem:[%s3 + $0x88] sm:$0xff] %v657
  %722 = vst [vmem:[%s3 + $0x90] sm:$0xff] %v658
  %723 = vst [vmem:[%s3 + $0x98] sm:$0xff] %v659
  %724 = vst [vmem:[%s3 + $0xa0] sm:$0xff] %v660
  %725 = vst [vmem:[%s3 + $0xa8] sm:$0xff] %v661
  %726 = vst [vmem:[%s3 + $0xb0] sm:$0xff] %v662
  %727 = vst [vmem:[%s3 + $0xb8] sm:$0xff] %v663
  %728 = vst [vmem:[%s3 + $0xc0] sm:$0xff] %v664
  %729 = vst [vmem:[%s3 + $0xc8] sm:$0xff] %v665
  %730 = vst [vmem:[%s3 + $0xd0] sm:$0xff] %v666
  %731 = vst [vmem:[%s3 + $0xd8] sm:$0xff] %v667
  %732 = vst [vmem:[%s3 + $0xe0] sm:$0xff] %v668
  %733 = vst [vmem:[%s3 + $0xe8] sm:$0xff] %v669
  %734 = vst [vmem:[%s3 + $0xf0] sm:$0xff] %v670
  %735 = vst [vmem:[%s3 + $0xf8] sm:$0xff] %v671
  %736 = vst [vmem:[%s3 + $0x100] sm:$0xff] %v672
  %737 = vst [vmem:[%s3 + $0x108] sm:$0xff] %v673
  %738 = vst [vmem:[%s3 + $0x110] sm:$0xff] %v674
  %739 = vst [vmem:[%s3 + $0x118] sm:$0xff] %v675
  %740 = vst [vmem:[%s3 + $0x120] sm:$0xff] %v676
  %741 = vst [vmem:[%s3 + $0x128] sm:$0xff] %v677
  %742 = vst [vmem:[%s3 + $0x130] sm:$0xff] %v678
  %743 = vst [vmem:[%s3 + $0x138] sm:$0xff] %v679
  %744 = vst [vmem:[%s3 + $0x140] sm:$0xff] %v680
  %745 = vst [vmem:[%s3 + $0x148] sm:$0xff] %v681
  %746 = vst [vmem:[%s3 + $0x150] sm:$0xff] %v682
  %747 = vst [vmem:[%s3 + $0x158] sm:$0xff] %v683
  %748 = vst [vmem:[%s3 + $0x160] sm:$0xff] %v684
  %749 = vst [vmem:[%s3 + $0x168] sm:$0xff] %v685
  %750 = vst [vmem:[%s3 + $0x170] sm:$0xff] %v686
  %751 = vst [vmem:[%s3 + $0x178] sm:$0xff] %v687
  %752 = vst [vmem:[%s3 + $0x180] sm:$0xff] %v688
  %753 = vst [vmem:[%s3 + $0x188] sm:$0xff] %v689
  %754 = vst [vmem:[%s3 + $0x190] sm:$0xff] %v690
  %755 = vst [vmem:[%s3 + $0x198] sm:$0xff] %v691
  %756 = vst [vmem:[%s3 + $0x1a0] sm:$0xff] %v692
  %757 = vst [vmem:[%s3 + $0x1a8] sm:$0xff] %v693
  %758 = vst [vmem:[%s3 + $0x1b0] sm:$0xff] %v694
  %759 = vst [vmem:[%s3 + $0x1b8] sm:$0xff] %v695
  %760 = vst [vmem:[%s3 + $0x1c0] sm:$0xff] %v696
  %761 = vst [vmem:[%s3 + $0x1c8] sm:$0xff] %v697
  %762 = vst [vmem:[%s3 + $0x1d0] sm:$0xff] %v698
  %763 = vst [vmem:[%s3 + $0x1d8] sm:$0xff] %v699
  %764 = vst [vmem:[%s3 + $0x1e0] sm:$0xff] %v700
  %765 = vst [vmem:[%s3 + $0x1e8] sm:$0xff] %v701
  %766 = vst [vmem:[%s3 + $0x1f0] sm:$0xff] %v702
  %767 = vst [vmem:[%s3 + $0x1f8] sm:$0xff] %v703
  // Predicated region
  $region18: #{a_call__.1} parent=0 // pred_check
    %p768 = pneg %p14
  $region19: #{a_call__.1} parent=0 // pred_check_branch
    %770 = sbr.rel (%p768) target = $region21
  $region20: #{a_call__.1} parent=0 // pred_region
    %v771 = vld [vmem:[%s3] sm:$0xff]
    %v772 = vld [vmem:[%s3 + $0x8] sm:$0xff]
    %v773 = vld [vmem:[%s3 + $0x10] sm:$0xff]
    %v774 = vld [vmem:[%s3 + $0x18] sm:$0xff]
    %v775 = vld [vmem:[%s3 + $0x20] sm:$0xff]
    %v776 = vld [vmem:[%s3 + $0x28] sm:$0xff]
    %v777 = vld [vmem:[%s3 + $0x30] sm:$0xff]
    %v778 = vld [vmem:[%s3 + $0x38] sm:$0xff]
    %v779 = vld [vmem:[%s3 + $0x40] sm:$0xff]
    %v780 = vld [vmem:[%s3 + $0x48] sm:$0xff]
    %v781 = vld [vmem:[%s3 + $0x50] sm:$0xff]
    %v782 = vld [vmem:[%s3 + $0x58] sm:$0xff]
    %v783 = vld [vmem:[%s3 + $0x60] sm:$0xff]
    %v784 = vld [vmem:[%s3 + $0x68] sm:$0xff]
    %v785 = vld [vmem:[%s3 + $0x70] sm:$0xff]
    %v786 = vld [vmem:[%s3 + $0x78] sm:$0xff]
    %v787 = vld [vmem:[%s3 + $0x80] sm:$0xff]
    %v788 = vld [vmem:[%s3 + $0x88] sm:$0xff]
    %v789 = vld [vmem:[%s3 + $0x90] sm:$0xff]
    %v790 = vld [vmem:[%s3 + $0x98] sm:$0xff]
    %v791 = vld [vmem:[%s3 + $0xa0] sm:$0xff]
    %v792 = vld [vmem:[%s3 + $0xa8] sm:$0xff]
    %v793 = vld [vmem:[%s3 + $0xb0] sm:$0xff]
    %v794 = vld [vmem:[%s3 + $0xb8] sm:$0xff]
    %v795 = vld [vmem:[%s3 + $0xc0] sm:$0xff]
    %v796 = vld [vmem:[%s3 + $0xc8] sm:$0xff]
    %v797 = vld [vmem:[%s3 + $0xd0] sm:$0xff]
    %v798 = vld [vmem:[%s3 + $0xd8] sm:$0xff]
    %v799 = vld [vmem:[%s3 + $0xe0] sm:$0xff]
    %v800 = vld [vmem:[%s3 + $0xe8] sm:$0xff]
    %v801 = vld [vmem:[%s3 + $0xf0] sm:$0xff]
    %v802 = vld [vmem:[%s3 + $0xf8] sm:$0xff]
    %v803 = vld [vmem:[%s3 + $0x100] sm:$0xff]
    %v804 = vld [vmem:[%s3 + $0x108] sm:$0xff]
    %v805 = vld [vmem:[%s3 + $0x110] sm:$0xff]
    %v806 = vld [vmem:[%s3 + $0x118] sm:$0xff]
    %v807 = vld [vmem:[%s3 + $0x120] sm:$0xff]
    %v808 = vld [vmem:[%s3 + $0x128] sm:$0xff]
    %v809 = vld [vmem:[%s3 + $0x130] sm:$0xff]
    %v810 = vld [vmem:[%s3 + $0x138] sm:$0xff]
    %v811 = vld [vmem:[%s3 + $0x140] sm:$0xff]
    %v812 = vld [vmem:[%s3 + $0x148] sm:$0xff]
    %v813 = vld [vmem:[%s3 + $0x150] sm:$0xff]
    %v814 = vld [vmem:[%s3 + $0x158] sm:$0xff]
    %v815 = vld [vmem:[%s3 + $0x160] sm:$0xff]
    %v816 = vld [vmem:[%s3 + $0x168] sm:$0xff]
    %v817 = vld [vmem:[%s3 + $0x170] sm:$0xff]
    %v818 = vld [vmem:[%s3 + $0x178] sm:$0xff]
    %v819 = vld [vmem:[%s3 + $0x180] sm:$0xff]
    %v820 = vld [vmem:[%s3 + $0x188] sm:$0xff]
    %v821 = vld [vmem:[%s3 + $0x190] sm:$0xff]
    %v822 = vld [vmem:[%s3 + $0x198] sm:$0xff]
    %v823 = vld [vmem:[%s3 + $0x1a0] sm:$0xff]
    %v824 = vld [vmem:[%s3 + $0x1a8] sm:$0xff]
    %v825 = vld [vmem:[%s3 + $0x1b0] sm:$0xff]
    %v826 = vld [vmem:[%s3 + $0x1b8] sm:$0xff]
    %v827 = vld [vmem:[%s3 + $0x1c0] sm:$0xff]
    %v828 = vld [vmem:[%s3 + $0x1c8] sm:$0xff]
    %v829 = vld [vmem:[%s3 + $0x1d0] sm:$0xff]
    %v830 = vld [vmem:[%s3 + $0x1d8] sm:$0xff]
    %v831 = vld [vmem:[%s3 + $0x1e0] sm:$0xff]
    %v832 = vld [vmem:[%s3 + $0x1e8] sm:$0xff]
    %v833 = vld [vmem:[%s3 + $0x1f0] sm:$0xff]
    %v834 = vld [vmem:[%s3 + $0x1f8] sm:$0xff]
    %v835 = vld [vmem:[%s2] sm:$0x1]
    %v837 = vperm.slane %v835, 0
    %v839 = vadd.f32 %v771, %v837
    %v840 = vadd.f32 %v772, %v837
    %v841 = vadd.f32 %v773, %v837
    %v842 = vadd.f32 %v774, %v837
    %v843 = vadd.f32 %v775, %v837
    %v844 = vadd.f32 %v776, %v837
    %v845 = vadd.f32 %v777, %v837
    %v846 = vadd.f32 %v778, %v837
    %v847 = vadd.f32 %v779, %v837
    %v848 = vadd.f32 %v780, %v837
    %v849 = vadd.f32 %v781, %v837
    %v850 = vadd.f32 %v782, %v837
    %v851 = vadd.f32 %v783, %v837
    %v852 = vadd.f32 %v784, %v837
    %v853 = vadd.f32 %v785, %v837
    %v854 = vadd.f32 %v786, %v837
    %v855 = vadd.f32 %v787, %v837
    %v856 = vadd.f32 %v788, %v837
    %v857 = vadd.f32 %v789, %v837
    %v858 = vadd.f32 %v790, %v837
    %v859 = vadd.f32 %v791, %v837
    %v860 = vadd.f32 %v792, %v837
    %v861 = vadd.f32 %v793, %v837
    %v862 = vadd.f32 %v794, %v837
    %v863 = vadd.f32 %v795, %v837
    %v864 = vadd.f32 %v796, %v837
    %v865 = vadd.f32 %v797, %v837
    %v866 = vadd.f32 %v798, %v837
    %v867 = vadd.f32 %v799, %v837
    %v868 = vadd.f32 %v800, %v837
    %v869 = vadd.f32 %v801, %v837
    %v870 = vadd.f32 %v802, %v837
    %v871 = vadd.f32 %v803, %v837
    %v872 = vadd.f32 %v804, %v837
    %v873 = vadd.f32 %v805, %v837
    %v874 = vadd.f32 %v806, %v837
    %v875 = vadd.f32 %v807, %v837
    %v876 = vadd.f32 %v808, %v837
    %v877 = vadd.f32 %v809, %v837
    %v878 = vadd.f32 %v810, %v837
    %v879 = vadd.f32 %v811, %v837
    %v880 = vadd.f32 %v812, %v837
    %v881 = vadd.f32 %v813, %v837
    %v882 = vadd.f32 %v814, %v837
    %v883 = vadd.f32 %v815, %v837
    %v884 = vadd.f32 %v816, %v837
    %v885 = vadd.f32 %v817, %v837
    %v886 = vadd.f32 %v818, %v837
    %v887 = vadd.f32 %v819, %v837
    %v888 = vadd.f32 %v820, %v837
    %v889 = vadd.f32 %v821, %v837
    %v890 = vadd.f32 %v822, %v837
    %v891 = vadd.f32 %v823, %v837
    %v892 = vadd.f32 %v824, %v837
    %v893 = vadd.f32 %v825, %v837
    %v894 = vadd.f32 %v826, %v837
    %v895 = vadd.f32 %v827, %v837
    %v896 = vadd.f32 %v828, %v837
    %v897 = vadd.f32 %v829, %v837
    %v898 = vadd.f32 %v830, %v837
    %v899 = vadd.f32 %v831, %v837
    %v900 = vadd.f32 %v832, %v837
    %v901 = vadd.f32 %v833, %v837
    %v902 = vadd.f32 %v834, %v837
    %v903 = vmax.f32 %v839, 0.0
    %v904 = vmax.f32 %v840, 0.0
    %v905 = vmax.f32 %v841, 0.0
    %v906 = vmax.f32 %v842, 0.0
    %v907 = vmax.f32 %v843, 0.0
    %v908 = vmax.f32 %v844, 0.0
    %v909 = vmax.f32 %v845, 0.0
    %v910 = vmax.f32 %v846, 0.0
    %v911 = vmax.f32 %v847, 0.0
    %v912 = vmax.f32 %v848, 0.0
    %v913 = vmax.f32 %v849, 0.0
    %v914 = vmax.f32 %v850, 0.0
    %v915 = vmax.f32 %v851, 0.0
    %v916 = vmax.f32 %v852, 0.0
    %v917 = vmax.f32 %v853, 0.0
    %v918 = vmax.f32 %v854, 0.0
    %v919 = vmax.f32 %v855, 0.0
    %v920 = vmax.f32 %v856, 0.0
    %v921 = vmax.f32 %v857, 0.0
    %v922 = vmax.f32 %v858, 0.0
    %v923 = vmax.f32 %v859, 0.0
    %v924 = vmax.f32 %v860, 0.0
    %v925 = vmax.f32 %v861, 0.0
    %v926 = vmax.f32 %v862, 0.0
    %v927 = vmax.f32 %v863, 0.0
    %v928 = vmax.f32 %v864, 0.0
    %v929 = vmax.f32 %v865, 0.0
    %v930 = vmax.f32 %v866, 0.0
    %v931 = vmax.f32 %v867, 0.0
    %v932 = vmax.f32 %v868, 0.0
    %v933 = vmax.f32 %v869, 0.0
    %v934 = vmax.f32 %v870, 0.0
    %v935 = vmax.f32 %v871, 0.0
    %v936 = vmax.f32 %v872, 0.0
    %v937 = vmax.f32 %v873, 0.0
    %v938 = vmax.f32 %v874, 0.0
    %v939 = vmax.f32 %v875, 0.0
    %v940 = vmax.f32 %v876, 0.0
    %v941 = vmax.f32 %v877, 0.0
    %v942 = vmax.f32 %v878, 0.0
    %v943 = vmax.f32 %v879, 0.0
    %v944 = vmax.f32 %v880, 0.0
    %v945 = vmax.f32 %v881, 0.0
    %v946 = vmax.f32 %v882, 0.0
    %v947 = vmax.f32 %v883, 0.0
    %v948 = vmax.f32 %v884, 0.0
    %v949 = vmax.f32 %v885, 0.0
    %v950 = vmax.f32 %v886, 0.0
    %v951 = vmax.f32 %v887, 0.0
    %v952 = vmax.f32 %v888, 0.0
    %v953 = vmax.f32 %v889, 0.0
    %v954 = vmax.f32 %v890, 0.0
    %v955 = vmax.f32 %v891, 0.0
    %v956 = vmax.f32 %v892, 0.0
    %v957 = vmax.f32 %v893, 0.0
    %v958 = vmax.f32 %v894, 0.0
    %v959 = vmax.f32 %v895, 0.0
    %v960 = vmax.f32 %v896, 0.0
    %v961 = vmax.f32 %v897, 0.0
    %v962 = vmax.f32 %v898, 0.0
    %v963 = vmax.f32 %v899, 0.0
    %v964 = vmax.f32 %v900, 0.0
    %v965 = vmax.f32 %v901, 0.0
    %v966 = vmax.f32 %v902, 0.0
    %967 = vst [vmem:[%s3] sm:$0xff] %v903
    %968 = vst [vmem:[%s3 + $0x8] sm:$0xff] %v904
    %969 = vst [vmem:[%s3 + $0x10] sm:$0xff] %v905
    %970 = vst [vmem:[%s3 + $0x18] sm:$0xff] %v906
    %971 = vst [vmem:[%s3 + $0x20] sm:$0xff] %v907
    %972 = vst [vmem:[%s3 + $0x28] sm:$0xff] %v908
    %973 = vst [vmem:[%s3 + $0x30] sm:$0xff] %v909
    %974 = vst [vmem:[%s3 + $0x38] sm:$0xff] %v910
    %975 = vst [vmem:[%s3 + $0x40] sm:$0xff] %v911
    %976 = vst [vmem:[%s3 + $0x48] sm:$0xff] %v912
    %977 = vst [vmem:[%s3 + $0x50] sm:$0xff] %v913
    %978 = vst [vmem:[%s3 + $0x58] sm:$0xff] %v914
    %979 = vst [vmem:[%s3 + $0x60] sm:$0xff] %v915
    %980 = vst [vmem:[%s3 + $0x68] sm:$0xff] %v916
    %981 = vst [vmem:[%s3 + $0x70] sm:$0xff] %v917
    %982 = vst [vmem:[%s3 + $0x78] sm:$0xff] %v918
    %983 = vst [vmem:[%s3 + $0x80] sm:$0xff] %v919
    %984 = vst [vmem:[%s3 + $0x88] sm:$0xff] %v920
    %985 = vst [vmem:[%s3 + $0x90] sm:$0xff] %v921
    %986 = vst [vmem:[%s3 + $0x98] sm:$0xff] %v922
    %987 = vst [vmem:[%s3 + $0xa0] sm:$0xff] %v923
    %988 = vst [vmem:[%s3 + $0xa8] sm:$0xff] %v924
    %989 = vst [vmem:[%s3 + $0xb0] sm:$0xff] %v925
    %990 = vst [vmem:[%s3 + $0xb8] sm:$0xff] %v926
    %991 = vst [vmem:[%s3 + $0xc0] sm:$0xff] %v927
    %992 = vst [vmem:[%s3 + $0xc8] sm:$0xff] %v928
    %993 = vst [vmem:[%s3 + $0xd0] sm:$0xff] %v929
    %994 = vst [vmem:[%s3 + $0xd8] sm:$0xff] %v930
    %995 = vst [vmem:[%s3 + $0xe0] sm:$0xff] %v931
    %996 = vst [vmem:[%s3 + $0xe8] sm:$0xff] %v932
    %997 = vst [vmem:[%s3 + $0xf0] sm:$0xff] %v933
    %998 = vst [vmem:[%s3 + $0xf8] sm:$0xff] %v934
    %999 = vst [vmem:[%s3 + $0x100] sm:$0xff] %v935
    %1000 = vst [vmem:[%s3 + $0x108] sm:$0xff] %v936
    %1001 = vst [vmem:[%s3 + $0x110] sm:$0xff] %v937
    %1002 = vst [vmem:[%s3 + $0x118] sm:$0xff] %v938
    %1003 = vst [vmem:[%s3 + $0x120] sm:$0xff] %v939
    %1004 = vst [vmem:[%s3 + $0x128] sm:$0xff] %v940
    %1005 = vst [vmem:[%s3 + $0x130] sm:$0xff] %v941
    %1006 = vst [vmem:[%s3 + $0x138] sm:$0xff] %v942
    %1007 = vst [vmem:[%s3 + $0x140] sm:$0xff] %v943
    %1008 = vst [vmem:[%s3 + $0x148] sm:$0xff] %v944
    %1009 = vst [vmem:[%s3 + $0x150] sm:$0xff] %v945
    %1010 = vst [vmem:[%s3 + $0x158] sm:$0xff] %v946
    %1011 = vst [vmem:[%s3 + $0x160] sm:$0xff] %v947
    %1012 = vst [vmem:[%s3 + $0x168] sm:$0xff] %v948
    %1013 = vst [vmem:[%s3 + $0x170] sm:$0xff] %v949
    %1014 = vst [vmem:[%s3 + $0x178] sm:$0xff] %v950
    %1015 = vst [vmem:[%s3 + $0x180] sm:$0xff] %v951
    %1016 = vst [vmem:[%s3 + $0x188] sm:$0xff] %v952
    %1017 = vst [vmem:[%s3 + $0x190] sm:$0xff] %v953
    %1018 = vst [vmem:[%s3 + $0x198] sm:$0xff] %v954
    %1019 = vst [vmem:[%s3 + $0x1a0] sm:$0xff] %v955
    %1020 = vst [vmem:[%s3 + $0x1a8] sm:$0xff] %v956
    %1021 = vst [vmem:[%s3 + $0x1b0] sm:$0xff] %v957
    %1022 = vst [vmem:[%s3 + $0x1b8] sm:$0xff] %v958
    %1023 = vst [vmem:[%s3 + $0x1c0] sm:$0xff] %v959
    %1024 = vst [vmem:[%s3 + $0x1c8] sm:$0xff] %v960
    %1025 = vst [vmem:[%s3 + $0x1d0] sm:$0xff] %v961
    %1026 = vst [vmem:[%s3 + $0x1d8] sm:$0xff] %v962
    %1027 = vst [vmem:[%s3 + $0x1e0] sm:$0xff] %v963
    %1028 = vst [vmem:[%s3 + $0x1e8] sm:$0xff] %v964
    %1029 = vst [vmem:[%s3 + $0x1f0] sm:$0xff] %v965
    %1030 = vst [vmem:[%s3 + $0x1f8] sm:$0xff] %v966
  $region21: #{a_call__.1} parent=0 // pred_fallthru
    _
  // Predicated region
  $region22: #{a_call__.1} parent=0 // pred_check
    _
  $region23: #{a_call__.1} parent=0 // pred_check_branch
    %1032 = sbr.rel (0) target = $region25
  $region24: #{a_call__.1} parent=0 // pred_region
    _
  $region25: #{a_call__.1} parent=0 // pred_fallthru
    _
  // Predicated region
  $region26: #{a_call__.1} parent=0 // pred_check
    _
  $region27: #{a_call__.1} parent=0 // pred_check_branch
    %1034 = sbr.rel (0) target = $region29
  $region28: #{a_call__.1} parent=0 // pred_region
    _
  $region29: #{a_call__.1} parent=0 // pred_fallthru
    _

</llo_original>
